<compile_context>
chip_gen: v6e
topology: v6e:2x2x1
jax: 0.10.0
libtpu: 0.0.40
codegen_flags: <defaults>
</compile_context>

<pallas_src>
import jax
import jax.numpy as jnp
from jax.experimental import pallas as pl
from jax.experimental.pallas import tpu as pltpu


def _round_up(n, m):
    return ((n + m - 1) // m) * m


def _pad_axis(a, axis, target):
    pad = target - a.shape[axis]
    if pad == 0:
        return a
    widths = [(0, 0)] * a.ndim
    widths[axis] = (0, pad)
    return jnp.pad(a, widths)


# --------------------------------------------------------------------------- #
# Kernel
# --------------------------------------------------------------------------- #
def ts_mlp_kernel(x_ref, w1_ref, b1_ref, w2_ref, b2_ref, o_ref):
    """One (batch-tile, hidden-tile) grid step of out = ReLU(x @ W1 + b1) @ W2 + b2.

    The f32 output block is resident across the hidden (reduction) axis, so it
    is used directly as the accumulator: seeded with b2 at h == 0, then each
    hidden tile adds its partial product. No VMEM scratch, no finalize copy.
    """
    h = pl.program_id(1)

    @pl.when(h == 0)
    def _init():
        # b2 is added exactly once by seeding the accumulator with it.
        o_ref[...] = jnp.broadcast_to(b2_ref[...], o_ref.shape)

    # MXU matmuls in bf16 with f32 accumulation; bias add + ReLU on the VPU in f32.
    hid = jnp.dot(x_ref[...], w1_ref[...], preferred_element_type=jnp.float32)
    hid = jnp.maximum(hid + b1_ref[...], 0.0)
    o_ref[...] += jnp.dot(
        hid.astype(w2_ref.dtype), w2_ref[...], preferred_element_type=jnp.float32
    )


# --------------------------------------------------------------------------- #
# Tiling / VMEM budgeting (all static Python on static shapes)
# --------------------------------------------------------------------------- #
def _vmem_estimate(tm, th, d_in_p, hidden_p, horizon_p):
    """Double-buffered VMEM footprint of one grid step, in bytes."""
    nbuf = 2
    x_b = nbuf * tm * d_in_p * 2            # bf16 activations
    w1_b = nbuf * d_in_p * th * 2           # bf16 W1 slab
    w2_b = nbuf * th * horizon_p * 2        # bf16 W2 slab
    b1_b = nbuf * 8 * th * 4                # f32 b1 slab (sublane-padded)
    b2_b = nbuf * 8 * horizon_p * 4         # f32 b2
    o_b = nbuf * tm * horizon_p * 4         # f32 output/accumulator
    return x_b + w1_b + w2_b + b1_b + b2_b + o_b


def _choose_tiles(B, d_in_p, hidden_p, horizon_p, *, tm_max=256,
                  vmem_budget=28 << 20):
    # Batch tile: multiple of 16 (bf16 sublane packing); feed the 256-wide MXU
    # when B allows; split into >= 2 tiles when B is large so both v7x cores
    # get work on the "parallel" batch axis.
    if B >= 2 * 128:
        nb_target = max(2, -(-B // tm_max))
        tm = min(_round_up(-(-B // nb_target), 16), tm_max)
    else:
        tm = min(_round_up(B, 16), tm_max)
    b_p = _round_up(B, tm)

    # Hidden (reduction) tile: largest multiple-of-128 divisor of hidden_p that
    # fits the VMEM budget (no wasted zero-padding FLOPs/DMA from a non-divisor
    # tile). th == hidden_p => nh == 1: W1/W2 index maps are grid-invariant and
    # the weights are fetched from HBM exactly once for the whole grid.
    cands = [d for d in range(hidden_p, 0, -128) if hidden_p % d == 0]
    th = cands[-1]  # 128 fallback if nothing fits the budget
    for c in cands:
        if _vmem_estimate(tm, c, d_in_p, hidden_p, horizon_p) <= vmem_budget:
            th = c
            break
    return tm, b_p, th


# --------------------------------------------------------------------------- #
# Parameter preparation (hoisted out of the forward path — done once)
# --------------------------------------------------------------------------- #
def prepare_params(params, *, compute_dtype=jnp.bfloat16):
    """Pad + cast the weights ONCE to their TPU-friendly padded forms."""
    w1, b1, w2, b2 = params["w1"], params["b1"], params["w2"], params["b2"]
    d_in, hidden = w1.shape
    horizon = w2.shape[1]

    d_in_p = _round_up(d_in, 128)
    hidden_p = _round_up(hidden, 128)
    horizon_p = _round_up(horizon, 128)     # lane-dense output store

    return {
        "w1": _pad_axis(_pad_axis(w1, 0, d_in_p), 1, hidden_p).astype(compute_dtype),
        "w2": _pad_axis(_pad_axis(w2, 0, hidden_p), 1, horizon_p).astype(compute_dtype),
        "b1": _pad_axis(b1.reshape(1, hidden), 1, hidden_p).astype(jnp.float32),
        "b2": _pad_axis(b2.reshape(1, horizon), 1, horizon_p).astype(jnp.float32),
        "d_in": d_in,
        "horizon": horizon,
        "compute_dtype": compute_dtype,
    }


# --------------------------------------------------------------------------- #
# Forward pass (== AbstractTimeSeriesModel.forward -> architecture(x))
# --------------------------------------------------------------------------- #
def time_series_forward(x, prepared):
    """x: (batch, seq, features) float32 -> (batch, horizon) float32."""
    w1_p, b1_p = prepared["w1"], prepared["b1"]
    w2_p, b2_p = prepared["w2"], prepared["b2"]
    d_in, horizon = prepared["d_in"], prepared["horizon"]
    compute_dtype = prepared["compute_dtype"]

    d_in_p, hidden_p = w1_p.shape
    horizon_p = w2_p.shape[1]

    B = x.shape[0]
    x2d = x.reshape(B, -1)                  # same as torch x.reshape(B, -1)
    assert x2d.shape[1] == d_in

    tm, b_p, th = _choose_tiles(B, d_in_p, hidden_p, horizon_p)
    nb, nh = b_p // tm, hidden_p // th

    # Only the activations are padded / cast per call (weights already done).
    x_p = _pad_axis(_pad_axis(x2d, 1, d_in_p), 0, b_p).astype(compute_dtype)

    est_bytes = _vmem_estimate(tm, th, d_in_p, hidden_p, horizon_p)
    vmem_limit = int(min(max(est_bytes * 5 // 4, 32 << 20), 48 << 20))

    cost = pl.CostEstimate(
        flops=2 * b_p * (d_in_p * hidden_p + hidden_p * horizon_p),
        transcendentals=0,
        bytes_accessed=(x_p.size * 2 + w1_p.size * 2 + w2_p.size * 2
                        + b1_p.size * 4 + b2_p.size * 4 + b_p * horizon_p * 4),
    )

    out = pl.pallas_call(
        ts_mlp_kernel,
        out_shape=jax.ShapeDtypeStruct((b_p, horizon_p), jnp.float32),
        grid_spec=pl.GridSpec(
            grid=(nb, nh),
            in_specs=[
                pl.BlockSpec((tm, d_in_p), lambda i, h: (i, 0)),      # x batch tile
                pl.BlockSpec((d_in_p, th), lambda i, h: (0, h)),      # W1 hidden slab
                pl.BlockSpec((1, th), lambda i, h: (0, h)),           # b1 hidden slab
                pl.BlockSpec((th, horizon_p), lambda i, h: (h, 0)),   # W2 hidden slab
                pl.BlockSpec((1, horizon_p), lambda i, h: (0, 0)),    # b2 (invariant)
            ],
            out_specs=pl.BlockSpec((tm, horizon_p), lambda i, h: (i, 0)),
        ),
        compiler_params=pltpu.CompilerParams(
            dimension_semantics=("parallel", "arbitrary"),
            vmem_limit_bytes=vmem_limit,
        ),
        cost_estimate=cost,
    )(x_p, w1_p, b1_p, w2_p, b2_p)

    return out[:B, :horizon]


def init_params(key, seq, features, hidden, horizon):
    d_in = seq * features
    k1, k2, k3, k4 = jax.random.split(key, 4)
    # Deterministic synthetic init (Glorot-ish scaling).
    w1 = jax.random.normal(k1, (d_in, hidden), jnp.float32) * (1.0 / jnp.sqrt(d_in))
    b1 = jax.random.normal(k2, (1, hidden), jnp.float32) * 0.01
    w2 = jax.random.normal(k3, (hidden, horizon), jnp.float32) * (1.0 / jnp.sqrt(hidden))
    b2 = jax.random.normal(k4, (1, horizon), jnp.float32) * 0.01
    return {"w1": w1, "b1": b1, "w2": w2, "b2": b2}


if __name__ == "__main__":
    key = jax.random.PRNGKey(0)
    batch, seq, features, hidden, horizon = 2, 8, 4, 32, 8

    kx, kp = jax.random.split(key)
    x = jax.random.normal(kx, (batch, seq, features), jnp.float32)
    params = init_params(kp, seq, features, hidden, horizon)

    prepared = prepare_params(params)        # weight pad+cast done once, off the hot path
    y = time_series_forward(x, prepared)
    y = jax.block_until_ready(y)

    # Reference check in plain JAX (same math the PyTorch architecture would do).
    # Tolerance relaxed because the kernel runs the matmuls in bf16 (f32 accumulate).
    x2d = x.reshape(batch, -1)
    ref = jnp.maximum(x2d @ params["w1"] + params["b1"], 0.0) @ params["w2"] + params["b2"]
    assert y.shape == (batch, horizon)
    assert jnp.allclose(y, ref, atol=3e-2, rtol=3e-2), float(jnp.max(jnp.abs(y - ref)))

    # TODO(synk): training_step / validation_step (loss computation) are host-side
    # training-loop glue, not part of the forward kernel.
    print("KERNEL_OK")
</pallas_src>

<mosaic_0001>
module attributes {stable_mosaic.version = 11 : i64} {
  func.func @ts_mlp_kernel(%arg0: i32, %arg1: i32, %arg2: memref<16x128xbf16, #tpu.memory_space<vmem>>, %arg3: memref<128x128xbf16, #tpu.memory_space<vmem>>, %arg4: memref<1x128xf32, #tpu.memory_space<vmem>>, %arg5: memref<128x128xbf16, #tpu.memory_space<vmem>>, %arg6: memref<1x128xf32, #tpu.memory_space<vmem>>, %arg7: memref<16x128xf32, #tpu.memory_space<vmem>>) attributes {dimension_semantics = [#tpu.dimension_semantics<parallel>, #tpu.dimension_semantics<arbitrary>], iteration_bounds = array<i64: 1, 1>, scalar_prefetch = 0 : i64, scratch_operands = 0 : i64, tpu.core_type = #tpu.core_type<tc>, window_params = [{transform_indices = @transform_0, window_bounds = array<i64: 16, 128>}, {transform_indices = @transform_1, window_bounds = array<i64: 128, 128>}, {transform_indices = @transform_2, window_bounds = array<i64: 1, 128>}, {transform_indices = @transform_3, window_bounds = array<i64: 128, 128>}, {pipeline_mode = #tpu.pipeline_mode<synchronous>, transform_indices = @transform_4, window_bounds = array<i64: 1, 128>}, {transform_indices = @transform_5, window_bounds = array<i64: 16, 128>}]} {
    %c0_i32 = arith.constant 0 : i32
    %0 = arith.cmpi eq, %arg1, %c0_i32 : i32
    %1 = arith.extui %0 : i1 to i32
    %c0_i32_0 = arith.constant 0 : i32
    %2 = arith.cmpi ne, %1, %c0_i32_0 : i32
    scf.if %2 {
      %c0_14 = arith.constant 0 : index
      %c0_15 = arith.constant 0 : index
      %17 = vector.load %arg6[%c0_14, %c0_15] : memref<1x128xf32, #tpu.memory_space<vmem>>, vector<1x128xf32>
      %18 = vector.shape_cast %17 : vector<1x128xf32> to vector<1x128xf32>
      %19 = vector.broadcast %18 : vector<1x128xf32> to vector<16x128xf32>
      %c0_16 = arith.constant 0 : index
      %c0_17 = arith.constant 0 : index
      %20 = vector.load %arg7[%c0_16, %c0_17] : memref<16x128xf32, #tpu.memory_space<vmem>>, vector<16x128xf32>
      tpu.vector_store %arg7[%c0_16, %c0_17], %19 {strides = array<i32>} : memref<16x128xf32, #tpu.memory_space<vmem>>, vector<16x128xf32>,
    } else {
    }
    %c0 = arith.constant 0 : index
    %c0_1 = arith.constant 0 : index
    %3 = vector.load %arg2[%c0, %c0_1] : memref<16x128xbf16, #tpu.memory_space<vmem>>, vector<16x128xbf16>
    %c0_2 = arith.constant 0 : index
    %c0_3 = arith.constant 0 : index
    %4 = vector.load %arg3[%c0_2, %c0_3] : memref<128x128xbf16, #tpu.memory_space<vmem>>, vector<128x128xbf16>
    %cst = arith.constant dense<0.000000e+00> : vector<16x128xf32>
    %5 = tpu.matmul %3, %4, %cst {dimension_numbers = #tpu.dot_dimension_numbers<[1], [0], [0], [1], [0, 0, 1, 1], [], []>} : vector<16x128xbf16>, vector<128x128xbf16>, vector<16x128xf32> -> vector<16x128xf32>
    %c0_4 = arith.constant 0 : index
    %c0_5 = arith.constant 0 : index
    %6 = vector.load %arg4[%c0_4, %c0_5] : memref<1x128xf32, #tpu.memory_space<vmem>>, vector<1x128xf32>
    %7 = vector.broadcast %6 : vector<1x128xf32> to vector<16x128xf32>
    %8 = arith.addf %5, %7 : vector<16x128xf32>
    %cst_6 = arith.constant 0.000000e+00 : f32
    %9 = vector.broadcast %cst_6 : f32 to vector<16x128xf32>
    %10 = arith.maximumf %8, %9 : vector<16x128xf32>
    %c0_7 = arith.constant 0 : index
    %c0_8 = arith.constant 0 : index
    %11 = vector.load %arg7[%c0_7, %c0_8] : memref<16x128xf32, #tpu.memory_space<vmem>>, vector<16x128xf32>
    %12 = arith.truncf %10 : vector<16x128xf32> to vector<16x128xbf16>
    %c0_9 = arith.constant 0 : index
    %c0_10 = arith.constant 0 : index
    %13 = vector.load %arg5[%c0_9, %c0_10] : memref<128x128xbf16, #tpu.memory_space<vmem>>, vector<128x128xbf16>
    %cst_11 = arith.constant dense<0.000000e+00> : vector<16x128xf32>
    %14 = tpu.matmul %12, %13, %cst_11 {dimension_numbers = #tpu.dot_dimension_numbers<[1], [0], [0], [1], [0, 0, 1, 1], [], []>} : vector<16x128xbf16>, vector<128x128xbf16>, vector<16x128xf32> -> vector<16x128xf32>
    %15 = arith.addf %11, %14 : vector<16x128xf32>
    %c0_12 = arith.constant 0 : index
    %c0_13 = arith.constant 0 : index
    %16 = vector.load %arg7[%c0_12, %c0_13] : memref<16x128xf32, #tpu.memory_space<vmem>>, vector<16x128xf32>
    tpu.vector_store %arg7[%c0_12, %c0_13], %15 {strides = array<i32>} : memref<16x128xf32, #tpu.memory_space<vmem>>, vector<16x128xf32>,
    return
  }
  func.func @transform_0(%arg0: i32, %arg1: i32) -> (i32, i32) {
    %c0_i32 = arith.constant 0 : i32
    %c0_i32_0 = arith.constant 0 : i32
    return %arg0, %c0_i32 : i32, i32
  }
  func.func @transform_1(%arg0: i32, %arg1: i32) -> (i32, i32) {
    %c0_i32 = arith.constant 0 : i32
    %c0_i32_0 = arith.constant 0 : i32
    return %c0_i32, %arg1 : i32, i32
  }
  func.func @transform_2(%arg0: i32, %arg1: i32) -> (i32, i32) {
    %c0_i32 = arith.constant 0 : i32
    %c0_i32_0 = arith.constant 0 : i32
    return %c0_i32, %arg1 : i32, i32
  }
  func.func @transform_3(%arg0: i32, %arg1: i32) -> (i32, i32) {
    %c0_i32 = arith.constant 0 : i32
    %c0_i32_0 = arith.constant 0 : i32
    return %arg1, %c0_i32 : i32, i32
  }
  func.func @transform_4(%arg0: i32, %arg1: i32) -> (i32, i32) {
    %c0_i32 = arith.constant 0 : i32
    %c0_i32_0 = arith.constant 0 : i32
    %c0_i32_1 = arith.constant 0 : i32
    return %c0_i32, %c0_i32_0 : i32, i32
  }
  func.func @transform_5(%arg0: i32, %arg1: i32) -> (i32, i32) {
    %c0_i32 = arith.constant 0 : i32
    %c0_i32_0 = arith.constant 0 : i32
    return %arg0, %c0_i32 : i32, i32
  }
}

</mosaic_0001>

<llo_original>
// kernel: tpu_custom_call.1
$region0: #{tpu_custom_call.1}
  #allocation0 [shape = 'u32[]', space=smem, size = 0x4, offset = 0x4, fixed_abs, tag = 'smem constant byte address 0x4 - core index']
  #allocation1 [shape = 'u32[144,128]{1,0:T(1,128)}', space=vmem, size = 0x12000, scoped, tag = 'internal scratch']
  %s0 = inlined_call_operand.hbm [shape: bf16[16,128], index: 0, kind: input, shape index: {}]
  %s1 = inlined_call_operand.hbm [shape: bf16[128,128], index: 1, kind: input, shape index: {}]
  %s2 = inlined_call_operand.vmem [shape: f32[1,128], index: 2, kind: input, shape index: {}]
  %s3 = inlined_call_operand.hbm [shape: bf16[128,128], index: 3, kind: input, shape index: {}]
  %s4 = inlined_call_operand.vmem [shape: f32[1,128], index: 4, kind: input, shape index: {}]
  %s5 = inlined_call_operand.hbm [shape: f32[16,128], index: 5, kind: output, shape index: {}]
  %s6 = sld [smem:[#allocation0]]
  $region46: #{tpu_custom_call.1} parent=0
    _
  %s8 = ssub.s32 1, %s6
  %s9 = scalar_select 0, %s8, %s6
  $region1: #{tpu_custom_call.1} parent=0
    #allocation2 [shape = 'u8[4096]{0}', space=vmem, size = 0x1000, scoped, tag = 'input window, operand 0, single buffered']
    #allocation3 [shape = 's32[1]{0}', space=sflag, size = 0x4, scoped, tag = 'scoped memory for tpu_custom_call.1']
    #allocation4 [shape = 's32[1]{0}', space=sflag, size = 0x4, scoped, tag = 'scoped memory for tpu_custom_call.1']
    #allocation5 [shape = 'u8[32768]{0}', space=vmem, size = 0x8000, scoped, tag = 'input window, operand 1, single buffered']
    #allocation6 [shape = 's32[1]{0}', space=sflag, size = 0x4, scoped, tag = 'scoped memory for tpu_custom_call.1']
    #allocation7 [shape = 'u8[32768]{0}', space=vmem, size = 0x8000, scoped, tag = 'input window, operand 3, single buffered']
    #allocation8 [shape = 'u8[8192]{0}', space=vmem, size = 0x2000, scoped, tag = 'output window, operand 0, single buffered']
    %10 = vsyncpa [#allocation3], 0
    %11 = vsyncpa [#allocation6], 0
    %12 = vsyncpa [#allocation4], 0
    // Predicated region
    $region2: #{tpu_custom_call.1} parent=1 // pred_check
      _
    $region3: #{tpu_custom_call.1} parent=1 // pred_check_branch
      %14 = sbr.rel (0) target = $region5
    $region4: #{tpu_custom_call.1} parent=1 // pred_region
      %s16 = ssub.s32 128, 128
      %17 = vsyncadd [#allocation3], %s16
      %s18 = sshll.u32 [#allocation2], 4
      %s19 = int_to_ptr.vmem [resolvable:$true] %s18
      %24 = dma.hbm_to_vmem [thread:$0]  %s0, 128, %s19, [#allocation3], 64, 64, 4
    $region5: #{tpu_custom_call.1} parent=1 // pred_fallthru
      _
    // Predicated region
    $region6: #{tpu_custom_call.1} parent=1 // pred_check
      _
    $region7: #{tpu_custom_call.1} parent=1 // pred_check_branch
      %26 = sbr.rel (0) target = $region9
    $region8: #{tpu_custom_call.1} parent=1 // pred_region
      %s28 = ssub.s32 1024, 1024
      %29 = vsyncadd [#allocation6], %s28
      %s30 = sshll.u32 [#allocation5], 4
      %s31 = int_to_ptr.vmem [resolvable:$true] %s30
      %36 = dma.hbm_to_vmem [thread:$0]  %s1, 1024, %s31, [#allocation6], 64, 64, 4
    $region9: #{tpu_custom_call.1} parent=1 // pred_fallthru
      _
    // Predicated region
    $region10: #{tpu_custom_call.1} parent=1 // pred_check
      _
    $region11: #{tpu_custom_call.1} parent=1 // pred_check_branch
      %38 = sbr.rel (0) target = $region13
    $region12: #{tpu_custom_call.1} parent=1 // pred_region
      _
    $region13: #{tpu_custom_call.1} parent=1 // pred_fallthru
      _
    // Predicated region
    $region14: #{tpu_custom_call.1} parent=1 // pred_check
      _
    $region15: #{tpu_custom_call.1} parent=1 // pred_check_branch
      %40 = sbr.rel (0) target = $region17
    $region16: #{tpu_custom_call.1} parent=1 // pred_region
      %s42 = ssub.s32 1024, 1024
      %43 = vsyncadd [#allocation6], %s42
      %s44 = sshll.u32 [#allocation7], 4
      %s45 = int_to_ptr.vmem [resolvable:$true] %s44
      %50 = dma.hbm_to_vmem [thread:$0]  %s3, 1024, %s45, [#allocation6], 64, 64, 4
    $region17: #{tpu_custom_call.1} parent=1 // pred_fallthru
      _
    // Predicated region
    $region18: #{tpu_custom_call.1} parent=1 // pred_check
      _
    $region19: #{tpu_custom_call.1} parent=1 // pred_check_branch
      %52 = sbr.rel (0) target = $region21
    $region20: #{tpu_custom_call.1} parent=1 // pred_region
      _
    $region21: #{tpu_custom_call.1} parent=1 // pred_fallthru
      _
    // Predicated region
    $region22: #{tpu_custom_call.1} parent=1 // pred_check
      _
    $region23: #{tpu_custom_call.1} parent=1 // pred_check_branch
      %54 = sbr.rel (0) target = $region25
    $region24: #{tpu_custom_call.1} parent=1 // pred_region
      %55 = dma.done [#allocation3], 128
    $region25: #{tpu_custom_call.1} parent=1 // pred_fallthru
      _
    // Predicated region
    $region26: #{tpu_custom_call.1} parent=1 // pred_check
      _
    $region27: #{tpu_custom_call.1} parent=1 // pred_check_branch
      %57 = sbr.rel (0) target = $region29
    $region28: #{tpu_custom_call.1} parent=1 // pred_region
      %58 = dma.done [#allocation6], 1024
    $region29: #{tpu_custom_call.1} parent=1 // pred_fallthru
      _
    // Predicated region
    $region30: #{tpu_custom_call.1} parent=1 // pred_check
      _
    $region31: #{tpu_custom_call.1} parent=1 // pred_check_branch
      %60 = sbr.rel (0) target = $region33
    $region32: #{tpu_custom_call.1} parent=1 // pred_region
      %61 = dma.done [#allocation6], 1024
    $region33: #{tpu_custom_call.1} parent=1 // pred_fallthru
      _
    %p63 = scmp.eq.s32.totalorder 0, 0
    // Predicated region
    $region34: #{tpu_custom_call.1} parent=1 // pred_check
      %p64 = pneg %p63
    $region35: #{tpu_custom_call.1} parent=1 // pred_check_branch
      %66 = sbr.rel (%p64) target = $region37
    $region36: #{tpu_custom_call.1} parent=1 // pred_region
      %v67 = vld [vmem:[%s4] sm:$0x1]
      %v69 = vlaneseq
      %v70 = vshrl.u32 %v69, 7
      %v71 = vsub.s32 0, %v70
      %v72 = vrot.slane %v67, %v71
      %74 = vst [vmem:[#allocation8] sm:$0xff] %v72
      %75 = vst [vmem:[#allocation8 + $0x8] sm:$0xff] %v72
    $region37: #{tpu_custom_call.1} parent=1 // pred_fallthru
      _
    %v76 = vld [vmem:[#allocation2] sm:$0xf]
    %v77 = vld [vmem:[#allocation2 + $0x4] sm:$0xf]
    %v78 = vld [vmem:[#allocation5] sm:$0xf]
    %v79 = vld [vmem:[#allocation5 + $0x4] sm:$0xf]
    %v80 = vld [vmem:[#allocation5 + $0x8] sm:$0xf]
    %v81 = vld [vmem:[#allocation5 + $0xc] sm:$0xf]
    %v82 = vld [vmem:[#allocation5 + $0x10] sm:$0xf]
    %v83 = vld [vmem:[#allocation5 + $0x14] sm:$0xf]
    %v84 = vld [vmem:[#allocation5 + $0x18] sm:$0xf]
    %v85 = vld [vmem:[#allocation5 + $0x1c] sm:$0xf]
    %v86 = vld [vmem:[#allocation5 + $0x20] sm:$0xf]
    %v87 = vld [vmem:[#allocation5 + $0x24] sm:$0xf]
    %v88 = vld [vmem:[#allocation5 + $0x28] sm:$0xf]
    %v89 = vld [vmem:[#allocation5 + $0x2c] sm:$0xf]
    %v90 = vld [vmem:[#allocation5 + $0x30] sm:$0xf]
    %v91 = vld [vmem:[#allocation5 + $0x34] sm:$0xf]
    %v92 = vld [vmem:[#allocation5 + $0x38] sm:$0xf]
    %v93 = vld [vmem:[#allocation5 + $0x3c] sm:$0xf]
    %v94 = vld [vmem:[%s2] sm:$0x1]
    %v96 = vlaneseq
    %v97 = vshrl.u32 %v96, 7
    %v98 = vsub.s32 0, %v97
    %v99 = vrot.slane %v94, %v98
    %v103 = vunpack.c.l.b16 %v76
    %v104 = vunpack.c.l.b16 %v77
    %v105 = vpack.c.b16 %v104, %v103
    %v123 = vunpack.c.l.b16 %v78
    %v124 = vunpack.c.l.b16 %v79
    %v125 = vunpack.c.l.b16 %v80
    %v126 = vunpack.c.l.b16 %v81
    %v127 = vunpack.c.l.b16 %v82
    %v128 = vunpack.c.l.b16 %v83
    %v129 = vunpack.c.l.b16 %v84
    %v130 = vunpack.c.l.b16 %v85
    %v131 = vunpack.c.l.b16 %v86
    %v132 = vunpack.c.l.b16 %v87
    %v133 = vunpack.c.l.b16 %v88
    %v134 = vunpack.c.l.b16 %v89
    %v135 = vunpack.c.l.b16 %v90
    %v136 = vunpack.c.l.b16 %v91
    %v137 = vunpack.c.l.b16 %v92
    %v138 = vunpack.c.l.b16 %v93
    %v139 = vpack.c.b16 %v124, %v123
    %v140 = vpack.c.b16 %v126, %v125
    %v141 = vpack.c.b16 %v128, %v127
    %v142 = vpack.c.b16 %v130, %v129
    %v143 = vpack.c.b16 %v132, %v131
    %v144 = vpack.c.b16 %v134, %v133
    %v145 = vpack.c.b16 %v136, %v135
    %v146 = vpack.c.b16 %v138, %v137
    %155 = vmatprep.subr.bf16.mxu0 0
    %156 = vmatpush1.bf16.msra.mxu0 %v146
    %157 = vmatprep.subr.bf16.mxu0 0
    %158 = vmatpush1.bf16.msra.mxu0 %v145
    %159 = vmatprep.subr.bf16.mxu0 0
    %160 = vmatpush1.bf16.msra.mxu0 %v144
    %161 = vmatprep.subr.bf16.mxu0 0
    %162 = vmatpush1.bf16.msra.mxu0 %v143
    %163 = vmatprep.subr.bf16.mxu0 0
    %164 = vmatpush1.bf16.msra.mxu0 %v142
    %165 = vmatprep.subr.bf16.mxu0 0
    %166 = vmatpush1.bf16.msra.mxu0 %v141
    %167 = vmatprep.subr.bf16.mxu0 0
    %168 = vmatpush1.bf16.msra.mxu0 %v140
    %169 = vmatprep.subr.bf16.mxu0 0
    %170 = vmatpush1.bf16.msra.mxu0 %v139
    %171 = vmatprep.subr.bf16.mxu0 0
    %172 = vmatpush2.bf16.msra.mxu0 0
    %173 = vmatprep.subr.bf16.mxu0 0
    %174 = vmatpush2.bf16.msra.mxu0 0
    %175 = vmatprep.subr.bf16.mxu0 0
    %176 = vmatpush2.bf16.msra.mxu0 0
    %177 = vmatprep.subr.bf16.mxu0 0
    %178 = vmatpush2.bf16.msra.mxu0 0
    %179 = vmatprep.subr.bf16.mxu0 0
    %180 = vmatpush2.bf16.msra.mxu0 0
    %181 = vmatprep.subr.bf16.mxu0 0
    %182 = vmatpush2.bf16.msra.mxu0 0
    %183 = vmatprep.subr.bf16.mxu0 0
    %184 = vmatpush2.bf16.msra.mxu0 0
    %185 = vmatprep.subr.bf16.mxu0 0
    %186 = vmatpush2.bf16.msra.mxu0 0
    %187 = vmatprep.mubr.bf16.mxu0 0
    %188 = vmatmul.mubr.bf16.gmra.mxu0 %v105
    %v189 = vpop.f32.mrf.mxu0
    %v190 = vadd.f32 %v99, %v189
    %v191 = vpop.f32.mrf.mxu0
    %v192 = vpop.f32.mrf.mxu0
    %v193 = vadd.f32 %v99, %v192
    %v194 = vpop.f32.mrf.mxu0
    %195 = vdwg.mxu0
    %v196 = vmax.f32 %v190, 0.0
    %v197 = vmax.f32 %v193, 0.0
    %v198 = vld [vmem:[#allocation8] sm:$0xff]
    %v199 = vld [vmem:[#allocation8 + $0x8] sm:$0xff]
    %v200 = vpack.c.bf16 %v197, %v196
    %v201 = vld [vmem:[#allocation7] sm:$0xf]
    %v202 = vld [vmem:[#allocation7 + $0x4] sm:$0xf]
    %v203 = vld [vmem:[#allocation7 + $0x8] sm:$0xf]
    %v204 = vld [vmem:[#allocation7 + $0xc] sm:$0xf]
    %v205 = vld [vmem:[#allocation7 + $0x10] sm:$0xf]
    %v206 = vld [vmem:[#allocation7 + $0x14] sm:$0xf]
    %v207 = vld [vmem:[#allocation7 + $0x18] sm:$0xf]
    %v208 = vld [vmem:[#allocation7 + $0x1c] sm:$0xf]
    %v209 = vld [vmem:[#allocation7 + $0x20] sm:$0xf]
    %v210 = vld [vmem:[#allocation7 + $0x24] sm:$0xf]
    %v211 = vld [vmem:[#allocation7 + $0x28] sm:$0xf]
    %v212 = vld [vmem:[#allocation7 + $0x2c] sm:$0xf]
    %v213 = vld [vmem:[#allocation7 + $0x30] sm:$0xf]
    %v214 = vld [vmem:[#allocation7 + $0x34] sm:$0xf]
    %v215 = vld [vmem:[#allocation7 + $0x38] sm:$0xf]
    %v216 = vld [vmem:[#allocation7 + $0x3c] sm:$0xf]
    %v233 = vunpack.c.l.b16 %v201
    %v234 = vunpack.c.l.b16 %v202
    %v235 = vunpack.c.l.b16 %v203
    %v236 = vunpack.c.l.b16 %v204
    %v237 = vunpack.c.l.b16 %v205
    %v238 = vunpack.c.l.b16 %v206
    %v239 = vunpack.c.l.b16 %v207
    %v240 = vunpack.c.l.b16 %v208
    %v241 = vunpack.c.l.b16 %v209
    %v242 = vunpack.c.l.b16 %v210
    %v243 = vunpack.c.l.b16 %v211
    %v244 = vunpack.c.l.b16 %v212
    %v245 = vunpack.c.l.b16 %v213
    %v246 = vunpack.c.l.b16 %v214
    %v247 = vunpack.c.l.b16 %v215
    %v248 = vunpack.c.l.b16 %v216
    %v249 = vpack.c.b16 %v234, %v233
    %v250 = vpack.c.b16 %v236, %v235
    %v251 = vpack.c.b16 %v238, %v237
    %v252 = vpack.c.b16 %v240, %v239
    %v253 = vpack.c.b16 %v242, %v241
    %v254 = vpack.c.b16 %v244, %v243
    %v255 = vpack.c.b16 %v246, %v245
    %v256 = vpack.c.b16 %v248, %v247
    %265 = vmatprep.subr.bf16.mxu0 0
    %266 = vmatpush1.bf16.msra.mxu0 %v256
    %267 = vmatprep.subr.bf16.mxu0 0
    %268 = vmatpush1.bf16.msra.mxu0 %v255
    %269 = vmatprep.subr.bf16.mxu0 0
    %270 = vmatpush1.bf16.msra.mxu0 %v254
    %271 = vmatprep.subr.bf16.mxu0 0
    %272 = vmatpush1.bf16.msra.mxu0 %v253
    %273 = vmatprep.subr.bf16.mxu0 0
    %274 = vmatpush1.bf16.msra.mxu0 %v252
    %275 = vmatprep.subr.bf16.mxu0 0
    %276 = vmatpush1.bf16.msra.mxu0 %v251
    %277 = vmatprep.subr.bf16.mxu0 0
    %278 = vmatpush1.bf16.msra.mxu0 %v250
    %279 = vmatprep.subr.bf16.mxu0 0
    %280 = vmatpush1.bf16.msra.mxu0 %v249
    %281 = vmatprep.subr.bf16.mxu0 0
    %282 = vmatpush2.bf16.msra.mxu0 0
    %283 = vmatprep.subr.bf16.mxu0 0
    %284 = vmatpush2.bf16.msra.mxu0 0
    %285 = vmatprep.subr.bf16.mxu0 0
    %286 = vmatpush2.bf16.msra.mxu0 0
    %287 = vmatprep.subr.bf16.mxu0 0
    %288 = vmatpush2.bf16.msra.mxu0 0
    %289 = vmatprep.subr.bf16.mxu0 0
    %290 = vmatpush2.bf16.msra.mxu0 0
    %291 = vmatprep.subr.bf16.mxu0 0
    %292 = vmatpush2.bf16.msra.mxu0 0
    %293 = vmatprep.subr.bf16.mxu0 0
    %294 = vmatpush2.bf16.msra.mxu0 0
    %295 = vmatprep.subr.bf16.mxu0 0
    %296 = vmatpush2.bf16.msra.mxu0 0
    %297 = vmatprep.mubr.bf16.mxu0 0
    %298 = vmatmul.mubr.bf16.gmra.mxu0 %v200
    %v299 = vpop.f32.mrf.mxu0
    %v300 = vadd.f32 0.0, %v299
    %v301 = vpop.f32.mrf.mxu0
    %v302 = vpop.f32.mrf.mxu0
    %v303 = vadd.f32 0.0, %v302
    %v304 = vpop.f32.mrf.mxu0
    %305 = vdwg.mxu0
    %v306 = vadd.f32 %v198, %v300
    %v307 = vadd.f32 %v199, %v303
    %308 = vst [vmem:[#allocation8] sm:$0xff] %v306
    %309 = vst [vmem:[#allocation8 + $0x8] sm:$0xff] %v307
    // Predicated region
    $region38: #{tpu_custom_call.1} parent=1 // pred_check
      _
    $region39: #{tpu_custom_call.1} parent=1 // pred_check_branch
      %311 = sbr.rel (0) target = $region41
    $region40: #{tpu_custom_call.1} parent=1 // pred_region
      %s313 = ssub.s32 256, 256
      %314 = vsyncadd [#allocation4], %s313
      %s315 = sshll.u32 [#allocation8], 4
      %s316 = int_to_ptr.vmem [resolvable:$true] %s315
      %321 = dma.vmem_to_hbm [thread:$0]  %s316, 256, %s5, [#allocation4], 128, 128, 8
    $region41: #{tpu_custom_call.1} parent=1 // pred_fallthru
      _
    // Predicated region
    $region42: #{tpu_custom_call.1} parent=1 // pred_check
      _
    $region43: #{tpu_custom_call.1} parent=1 // pred_check_branch
      %323 = sbr.rel (0) target = $region45
    $region44: #{tpu_custom_call.1} parent=1 // pred_region
      %324 = dma.done [#allocation4], 256
    $region45: #{tpu_custom_call.1} parent=1 // pred_fallthru
      _
    %325 = vsyncpa [#allocation3], 1
    %326 = vsyncpa [#allocation6], 1
    %327 = vsyncpa [#allocation4], 1

</llo_original>
